<compile_context>
chip_gen: v7x
topology: tpu7x:2x2x1
jax: 0.10.0
libtpu: 0.0.40
codegen_flags: <defaults>
</compile_context>

<pallas_src>
import jax
import jax.numpy as jnp
from jax import lax
from jax.experimental import pallas as pl
from jax.experimental.pallas import tpu as pltpu

_LANE = 128
_ROW_QUANTUM = 256  # row-tile quantum: multiple of lanes (128) and MXU (256)


def _head_kernel(x_ref, w1t_ref, b1_ref, w2t_ref, b2_ref, o_ref):
    """Fused Linear -> ReLU -> Linear for one row tile, computed transposed.

    x_ref:   (tile_rows, F)  rows on sublanes, features on lanes
    w1t_ref: (H, F)          first Linear weight, pre-transposed
    b1_ref:  (H, 1)          f32
    w2t_ref: (O, H)          second Linear weight, pre-transposed
    b2_ref:  (O, 1)          f32
    o_ref:   (O, tile_rows)  lane-dense output (rows on the lane axis)
    """
    x = x_ref[...]
    # h_t[h, m] = sum_f w1[f, h] * x[m, f]: contract the feature axis of both
    # operands (A @ B^T form, same dimension-numbers pattern as q @ k^T).
    h_t = lax.dot_general(
        w1t_ref[...], x,
        dimension_numbers=(((1,), (1,)), ((), ())),
        preferred_element_type=jnp.float32)               # (H, tile_rows) f32
    h_t = jnp.maximum(h_t + b1_ref[...], 0.0)             # bias (lane bcast) + ReLU
    # Second projection: O is tiny; one cheap MXU pass streaming h_t.  Cast the
    # activation to the weight dtype so a bf16 compute path stays bf16 on the MXU.
    out_t = jnp.dot(w2t_ref[...], h_t.astype(w2t_ref.dtype),
                    preferred_element_type=jnp.float32)   # (O, tile_rows)
    o_ref[...] = (out_t + b2_ref[...]).astype(o_ref.dtype)


def _round_up(n: int, m: int) -> int:
    return ((n + m - 1) // m) * m


def _pick_tile_rows(M, F, H, O, itemsize, max_tile_rows, vmem_budget_bytes):
    """Choose the row tile from a VMEM budget and a >=2-tile megacore target."""
    if M <= 2 * _LANE:
        # Single small tile; round to 128 so the (O, tile_rows) output block
        # stays lane-dense (unmasked vst) and the writeback DMA is full-lane.
        return _round_up(max(M, 1), _LANE)

    # Per-grid-step VMEM bytes: x and output blocks are double-buffered by the
    # BlockSpec pipeline, weights are resident (counted double-buffered to be
    # conservative - they are tiny at these shapes), and the (H, tile_rows)
    # f32 intermediate h_t lives in compiler scratch.
    weight_bytes = 2 * (itemsize * (H * F + O * H) + 4 * (H + O))

    def step_bytes(t):
        return (weight_bytes
                + 2 * itemsize * t * F      # x double-buffer
                + 2 * 4 * t * O             # output double-buffer (f32)
                + 4 * t * H)                # h_t intermediate

    tile = max_tile_rows
    while tile > _ROW_QUANTUM and step_bytes(tile) > vmem_budget_bytes:
        tile -= _ROW_QUANTUM

    # v7x has two TensorCores: ensure the "parallel" grid axis has at least
    # two tiles so both cores get work (neutral on single-TC v5e/v6e).
    tile = min(tile, _round_up(pl.cdiv(M, 2), _ROW_QUANTUM))
    return tile


def tsmixer_head(x, w1, b1, w2, b2, *,
                 max_tile_rows: int = 8192,
                 compute_dtype=None,
                 vmem_budget_bytes: int = 40 * 1024 * 1024):
    """Apply the TSMixer prediction head.

    x:  [B, S, feature_dim]
    w1: [feature_dim, hidden]   b1: [hidden]
    w2: [hidden, output_dim]    b2: [output_dim]
    compute_dtype: optional narrower dtype (e.g. jnp.bfloat16) for x/W1/W2;
                   accumulation, biases and the output stay f32.
    returns [B, S, output_dim] in x.dtype.
    """
    assert max_tile_rows % _ROW_QUANTUM == 0, "row tile must stay lane/MXU aligned"
    B, S, F = x.shape
    H = w1.shape[1]
    O = w2.shape[1]
    M = B * S
    out_dtype = x.dtype

    # Tiny reshapes/transposes of the weights (negligible vs. x traffic).
    x2 = x.reshape(M, F)
    w1_t = w1.T                               # (H, F)
    w2_t = w2.T                               # (O, H)
    b1_c = b1.reshape(H, 1).astype(jnp.float32)
    b2_c = b2.reshape(O, 1).astype(jnp.float32)
    if compute_dtype is not None:
        x2 = x2.astype(compute_dtype)
        w1_t = w1_t.astype(compute_dtype)
        w2_t = w2_t.astype(compute_dtype)
    itemsize = jnp.dtype(x2.dtype).itemsize

    tile_rows = _pick_tile_rows(M, F, H, O, itemsize, max_tile_rows,
                                vmem_budget_bytes)
    num_tiles = pl.cdiv(M, tile_rows)
    m_total = num_tiles * tile_rows           # lane-padded output row count

    flops = 2 * M * (F * H + H * O)
    bytes_accessed = (itemsize * (M * F + F * H + H * O)
                      + 4 * (H + O) + 4 * M * O)

    out_t = pl.pallas_call(
        _head_kernel,
        out_shape=jax.ShapeDtypeStruct((O, m_total), out_dtype),
        grid_spec=pltpu.PrefetchScalarGridSpec(
            num_scalar_prefetch=0,
            grid=(num_tiles,),
            in_specs=[
                pl.BlockSpec((tile_rows, F), lambda i: (i, 0)),   # x row tile
                pl.BlockSpec((H, F), lambda i: (0, 0)),           # w1^T (resident)
                pl.BlockSpec((H, 1), lambda i: (0, 0)),           # b1
                pl.BlockSpec((O, H), lambda i: (0, 0)),           # w2^T (resident)
                pl.BlockSpec((O, 1), lambda i: (0, 0)),           # b2
            ],
            out_specs=pl.BlockSpec((O, tile_rows), lambda i: (0, i)),
        ),
        compiler_params=pltpu.CompilerParams(
            dimension_semantics=("parallel",),
            vmem_limit_bytes=48 * 1024 * 1024,   # < v7x's 64 MiB physical VMEM
        ),
        cost_estimate=pl.CostEstimate(
            flops=flops, transcendentals=0, bytes_accessed=bytes_accessed),
    )(x2, w1_t, b1_c, w2_t, b2_c)

    # (O, m_total) -> trim lane padding -> [B, S, O]; tiny copy (M*O elems).
    return out_t[:, :M].T.reshape(B, S, O)


def _reference(x, w1, b1, w2, b2):
    hp = jax.lax.Precision.HIGHEST
    h = jnp.maximum(jnp.einsum("bsf,fh->bsh", x, w1, precision=hp) + b1, 0.0)
    return jnp.einsum("bsh,ho->bso", h, w2, precision=hp) + b2


def _make_params(key, feature_dim, hidden_size, output_dim):
    kw1, kb1, kw2, kb2 = jax.random.split(key, 4)
    s1 = 1.0 / jnp.sqrt(feature_dim)
    s2 = 1.0 / jnp.sqrt(hidden_size)
    w1 = jax.random.uniform(kw1, (feature_dim, hidden_size), jnp.float32, -s1, s1)
    b1 = jax.random.uniform(kb1, (hidden_size,), jnp.float32, -s1, s1)
    w2 = jax.random.uniform(kw2, (hidden_size, output_dim), jnp.float32, -s2, s2)
    b2 = jax.random.uniform(kb2, (output_dim,), jnp.float32, -s2, s2)
    return w1, b1, w2, b2


if __name__ == "__main__":
    key = jax.random.PRNGKey(0)
    k1, k2, k3, k4 = jax.random.split(key, 4)

    # Case 1: canonical small shapes for the module's forward:
    #   x: [batch=2, seq_len=8, feature_dim=32], hidden=32, output_dim=1
    # (single 128-row tile, lane-dense output).
    batch, seq_len, feature_dim, hidden_size, output_dim = 2, 8, 32, 32, 1
    x = jax.random.normal(k1, (batch, seq_len, feature_dim), jnp.float32)
    w1, b1, w2, b2 = _make_params(k2, feature_dim, hidden_size, output_dim)
    out = jax.block_until_ready(tsmixer_head(x, w1, b1, w2, b2))
    ref = _reference(x, w1, b1, w2, b2)
    assert out.shape == (batch, seq_len, output_dim)
    assert jnp.allclose(out, ref, atol=2e-5, rtol=2e-5)

    # Case 2: multi-tile grid (>= 2 tiles for megacore) with a ragged last row
    # block and output_dim > 1.
    batch, seq_len, feature_dim, hidden_size, output_dim = 3, 250, 48, 64, 3
    x = jax.random.normal(k3, (batch, seq_len, feature_dim), jnp.float32)
    w1, b1, w2, b2 = _make_params(k4, feature_dim, hidden_size, output_dim)
    out = jax.block_until_ready(tsmixer_head(x, w1, b1, w2, b2))
    ref = _reference(x, w1, b1, w2, b2)
    assert out.shape == (batch, seq_len, output_dim)
    assert jnp.allclose(out, ref, atol=2e-5, rtol=2e-5)

    # Case 3: optional bf16 compute path (halves dominant HBM traffic); loose
    # tolerance since bf16 matmuls intentionally deviate from fp32 numerics.
    out_bf16 = jax.block_until_ready(
        tsmixer_head(x, w1, b1, w2, b2, compute_dtype=jnp.bfloat16))
    assert out_bf16.shape == (batch, seq_len, output_dim)
    assert jnp.allclose(out_bf16, ref, atol=1e-1, rtol=1e-1)

    print("KERNEL_OK")
</pallas_src>

<mosaic_0001>
module attributes {stable_mosaic.version = 11 : i64} {
  func.func @_head_kernel(%arg0: i32, %arg1: memref<128x32xf32, #tpu.memory_space<vmem>>, %arg2: memref<32x32xf32, #tpu.memory_space<vmem>>, %arg3: memref<32x1xf32, #tpu.memory_space<vmem>>, %arg4: memref<1x32xf32, #tpu.memory_space<vmem>>, %arg5: memref<1x1xf32, #tpu.memory_space<vmem>>, %arg6: memref<1x128xf32, #tpu.memory_space<vmem>>) attributes {dimension_semantics = [#tpu.dimension_semantics<parallel>], iteration_bounds = array<i64: 1>, scalar_prefetch = 0 : i64, scratch_operands = 0 : i64, tpu.core_type = #tpu.core_type<tc>, window_params = [{transform_indices = @transform_0, window_bounds = array<i64: 128, 32>}, {pipeline_mode = #tpu.pipeline_mode<synchronous>, transform_indices = @transform_1, window_bounds = array<i64: 32, 32>}, {pipeline_mode = #tpu.pipeline_mode<synchronous>, transform_indices = @transform_2, window_bounds = array<i64: 32, 1>}, {pipeline_mode = #tpu.pipeline_mode<synchronous>, transform_indices = @transform_3, window_bounds = array<i64: 1, 32>}, {pipeline_mode = #tpu.pipeline_mode<synchronous>, transform_indices = @transform_4, window_bounds = array<i64: 1, 1>}, {transform_indices = @transform_5, window_bounds = array<i64: 1, 128>}]} {
    %c0 = arith.constant 0 : index
    %c0_0 = arith.constant 0 : index
    %0 = vector.load %arg1[%c0, %c0_0] : memref<128x32xf32, #tpu.memory_space<vmem>>, vector<128x32xf32>
    %c0_1 = arith.constant 0 : index
    %c0_2 = arith.constant 0 : index
    %1 = vector.load %arg2[%c0_1, %c0_2] : memref<32x32xf32, #tpu.memory_space<vmem>>, vector<32x32xf32>
    %cst = arith.constant dense<0.000000e+00> : vector<32x128xf32>
    %2 = tpu.matmul %1, %0, %cst {dimension_numbers = #tpu.dot_dimension_numbers<[1], [1], [0], [0], [0, 0, 1, 0], [], []>} : vector<32x32xf32>, vector<128x32xf32>, vector<32x128xf32> -> vector<32x128xf32>
    %c0_3 = arith.constant 0 : index
    %c0_4 = arith.constant 0 : index
    %3 = vector.load %arg3[%c0_3, %c0_4] : memref<32x1xf32, #tpu.memory_space<vmem>>, vector<32x1xf32>
    %4 = vector.broadcast %3 : vector<32x1xf32> to vector<32x128xf32>
    %5 = arith.addf %2, %4 : vector<32x128xf32>
    %cst_5 = arith.constant 0.000000e+00 : f32
    %6 = vector.broadcast %cst_5 : f32 to vector<32x128xf32>
    %7 = arith.maximumf %5, %6 : vector<32x128xf32>
    %c0_6 = arith.constant 0 : index
    %c0_7 = arith.constant 0 : index
    %8 = vector.load %arg4[%c0_6, %c0_7] : memref<1x32xf32, #tpu.memory_space<vmem>>, vector<1x32xf32>
    %cst_8 = arith.constant dense<0.000000e+00> : vector<1x128xf32>
    %9 = tpu.matmul %8, %7, %cst_8 {dimension_numbers = #tpu.dot_dimension_numbers<[1], [0], [0], [1], [0, 0, 1, 1], [], []>} : vector<1x32xf32>, vector<32x128xf32>, vector<1x128xf32> -> vector<1x128xf32>
    %c0_9 = arith.constant 0 : index
    %c0_10 = arith.constant 0 : index
    %10 = vector.load %arg5[%c0_9, %c0_10] : memref<1x1xf32, #tpu.memory_space<vmem>>, vector<1x1xf32>
    %11 = vector.broadcast %10 : vector<1x1xf32> to vector<1x128xf32>
    %12 = arith.addf %9, %11 : vector<1x128xf32>
    %c0_11 = arith.constant 0 : index
    %c0_12 = arith.constant 0 : index
    %13 = vector.load %arg6[%c0_11, %c0_12] : memref<1x128xf32, #tpu.memory_space<vmem>>, vector<1x128xf32>
    tpu.vector_store %arg6[%c0_11, %c0_12], %12 {strides = array<i32>} : memref<1x128xf32, #tpu.memory_space<vmem>>, vector<1x128xf32>,
    return
  }
  func.func @transform_0(%arg0: i32) -> (i32, i32) {
    %c0_i32 = arith.constant 0 : i32
    %c0_i32_0 = arith.constant 0 : i32
    return %arg0, %c0_i32 : i32, i32
  }
  func.func @transform_1(%arg0: i32) -> (i32, i32) {
    %c0_i32 = arith.constant 0 : i32
    %c0_i32_0 = arith.constant 0 : i32
    %c0_i32_1 = arith.constant 0 : i32
    return %c0_i32, %c0_i32_0 : i32, i32
  }
  func.func @transform_2(%arg0: i32) -> (i32, i32) {
    %c0_i32 = arith.constant 0 : i32
    %c0_i32_0 = arith.constant 0 : i32
    %c0_i32_1 = arith.constant 0 : i32
    return %c0_i32, %c0_i32_0 : i32, i32
  }
  func.func @transform_3(%arg0: i32) -> (i32, i32) {
    %c0_i32 = arith.constant 0 : i32
    %c0_i32_0 = arith.constant 0 : i32
    %c0_i32_1 = arith.constant 0 : i32
    return %c0_i32, %c0_i32_0 : i32, i32
  }
  func.func @transform_4(%arg0: i32) -> (i32, i32) {
    %c0_i32 = arith.constant 0 : i32
    %c0_i32_0 = arith.constant 0 : i32
    %c0_i32_1 = arith.constant 0 : i32
    return %c0_i32, %c0_i32_0 : i32, i32
  }
  func.func @transform_5(%arg0: i32) -> (i32, i32) {
    %c0_i32 = arith.constant 0 : i32
    %c0_i32_0 = arith.constant 0 : i32
    return %c0_i32, %arg0 : i32, i32
  }
}

</mosaic_0001>

<llo_original>
// kernel: tpu_custom_call.1
$region0: #{tpu_custom_call.1}
  #allocation0 [shape = 'u32[]', space=smem, size = 0x4, offset = 0x4, fixed_abs, tag = 'smem constant byte address 0x4 - core index']
  #allocation1 [shape = 'u32[144,128]{1,0:T(1,128)}', space=vmem, size = 0x12000, scoped, tag = 'internal scratch']
  #allocation2 [shape = 'f32[1,1]{1,0:T(1,128)S(1)}', space=vmem, size = 0x200, scoped, tag = 'scoped memory for tpu_custom_call.1']
  %s0 = inlined_call_operand.hbm [shape: f32[16,32], index: 0, kind: input, shape index: {}]
  %s1 = inlined_call_operand.vmem [shape: f32[32,32], index: 1, kind: input, shape index: {}]
  %s2 = inlined_call_operand.vmem [shape: f32[32,1], index: 2, kind: input, shape index: {}]
  %s3 = inlined_call_operand.vmem [shape: f32[1,32], index: 3, kind: input, shape index: {}]
  %s4 = inlined_call_operand.<no memory space> [shape: f32[1,1], index: 4, kind: input, shape index: {}]
  %s5 = inlined_call_operand.hbm [shape: f32[1,128], index: 5, kind: output, shape index: {}]
  %s6 = sld [smem:[#allocation0]]
  $region34: #{tpu_custom_call.1} parent=0
    _
  %s8 = ssub.s32 1, %s6
  %s9 = scalar_select 0, %s8, %s6
  %v10 = vstv %s4
  %11 = vst [vmem:[#allocation2] sm:$0x1] %v10
  $region1: #{tpu_custom_call.1} parent=0
    #allocation3 [shape = 'u8[65536]{0}', space=vmem, size = 0x10000, scoped, tag = 'input window, operand 0, single buffered']
    #allocation4 [shape = 's32[1]{0}', space=sflag, size = 0x4, scoped, tag = 'scoped memory for tpu_custom_call.1']
    #allocation5 [shape = 's32[1]{0}', space=sflag, size = 0x4, scoped, tag = 'scoped memory for tpu_custom_call.1']
    #allocation6 [shape = 'u8[512]{0}', space=vmem, size = 0x400, scoped, tag = 'output window, operand 0, single buffered']
    %12 = vsyncpa [#allocation4], 0
    %13 = vsyncpa [#allocation5], 0
    // Predicated region
    $region2: #{tpu_custom_call.1} parent=1 // pred_check
      _
    $region3: #{tpu_custom_call.1} parent=1 // pred_check_branch
      %15 = sbr.rel (0) target = $region5
    $region4: #{tpu_custom_call.1} parent=1 // pred_region
      %s17 = ssub.s32 2048, 256
      %18 = vsyncadd [#allocation4], %s17
      %s19 = sshll.u32 [#allocation3], 4
      %s20 = int_to_ptr.vmem [resolvable:$true] %s19
      %25 = dma.hbm_to_vmem [thread:$0]  %s0, 256, %s20, [#allocation4], 128, 128, 8
    $region5: #{tpu_custom_call.1} parent=1 // pred_fallthru
      _
    // Predicated region
    $region6: #{tpu_custom_call.1} parent=1 // pred_check
      _
    $region7: #{tpu_custom_call.1} parent=1 // pred_check_branch
      %27 = sbr.rel (0) target = $region9
    $region8: #{tpu_custom_call.1} parent=1 // pred_region
      _
    $region9: #{tpu_custom_call.1} parent=1 // pred_fallthru
      _
    // Predicated region
    $region10: #{tpu_custom_call.1} parent=1 // pred_check
      _
    $region11: #{tpu_custom_call.1} parent=1 // pred_check_branch
      %29 = sbr.rel (0) target = $region13
    $region12: #{tpu_custom_call.1} parent=1 // pred_region
      _
    $region13: #{tpu_custom_call.1} parent=1 // pred_fallthru
      _
    // Predicated region
    $region14: #{tpu_custom_call.1} parent=1 // pred_check
      _
    $region15: #{tpu_custom_call.1} parent=1 // pred_check_branch
      %31 = sbr.rel (0) target = $region17
    $region16: #{tpu_custom_call.1} parent=1 // pred_region
      _
    $region17: #{tpu_custom_call.1} parent=1 // pred_fallthru
      _
    // Predicated region
    $region18: #{tpu_custom_call.1} parent=1 // pred_check
      _
    $region19: #{tpu_custom_call.1} parent=1 // pred_check_branch
      %33 = sbr.rel (0) target = $region21
    $region20: #{tpu_custom_call.1} parent=1 // pred_region
      _
    $region21: #{tpu_custom_call.1} parent=1 // pred_fallthru
      _
    // Predicated region
    $region22: #{tpu_custom_call.1} parent=1 // pred_check
      _
    $region23: #{tpu_custom_call.1} parent=1 // pred_check_branch
      %35 = sbr.rel (0) target = $region25
    $region24: #{tpu_custom_call.1} parent=1 // pred_region
      %36 = dma.done [#allocation4], 2048
    $region25: #{tpu_custom_call.1} parent=1 // pred_fallthru
      _
    %v37 = vld [vmem:[#allocation3] sm:$0xff]
    %v38 = vld [vmem:[#allocation3 + $0x8] sm:$0xff]
    %v39 = vld [vmem:[#allocation3 + $0x10] sm:$0xff]
    %v40 = vld [vmem:[#allocation3 + $0x18] sm:$0xff]
    %v41 = vld [vmem:[#allocation3 + $0x20] sm:$0xff]
    %v42 = vld [vmem:[#allocation3 + $0x28] sm:$0xff]
    %v43 = vld [vmem:[#allocation3 + $0x30] sm:$0xff]
    %v44 = vld [vmem:[#allocation3 + $0x38] sm:$0xff]
    %v45 = vld [vmem:[#allocation3 + $0x40] sm:$0xff]
    %v46 = vld [vmem:[#allocation3 + $0x48] sm:$0xff]
    %v47 = vld [vmem:[#allocation3 + $0x50] sm:$0xff]
    %v48 = vld [vmem:[#allocation3 + $0x58] sm:$0xff]
    %v49 = vld [vmem:[#allocation3 + $0x60] sm:$0xff]
    %v50 = vld [vmem:[#allocation3 + $0x68] sm:$0xff]
    %v51 = vld [vmem:[#allocation3 + $0x70] sm:$0xff]
    %v52 = vld [vmem:[#allocation3 + $0x78] sm:$0xff]
    %v53 = vld [vmem:[%s1] sm:$0xff]
    %v54 = vld [vmem:[%s1 + $0x8] sm:$0xff]
    %v55 = vld [vmem:[%s1 + $0x10] sm:$0xff]
    %v56 = vld [vmem:[%s1 + $0x18] sm:$0xff]
    %v57 = vld [vmem:[%s2] sm:$0xff]
    %v58 = vld [vmem:[%s2 + $0x8] sm:$0xff]
    %v59 = vld [vmem:[%s2 + $0x10] sm:$0xff]
    %v60 = vld [vmem:[%s2 + $0x18] sm:$0xff]
    %62 = vset.pattern.permute.xlu0 0
    %63 = vperm.xlu0 %62, %v57
    %v64 = vpop.permute.xlu0 %63
    %67 = vset.pattern.permute.xlu0 0
    %68 = vperm.xlu0 %67, %v58
    %v69 = vpop.permute.xlu0 %68
    %72 = vset.pattern.permute.xlu0 0
    %73 = vperm.xlu0 %72, %v59
    %v74 = vpop.permute.xlu0 %73
    %77 = vset.pattern.permute.xlu0 0
    %78 = vperm.xlu0 %77, %v60
    %v79 = vpop.permute.xlu0 %78
    %vm81 = vcmask 261120
    %v83 = vsel %vm81, %v53, 0
    %v86 = vsel %vm81, %v54, 0
    %v89 = vsel %vm81, %v55, 0
    %v92 = vsel %vm81, %v56, 0
    %v95 = vsel %vm81, %v37, 0
    %v98 = vsel %vm81, %v38, 0
    %v101 = vsel %vm81, %v39, 0
    %v104 = vsel %vm81, %v40, 0
    %v107 = vsel %vm81, %v41, 0
    %v110 = vsel %vm81, %v42, 0
    %v113 = vsel %vm81, %v43, 0
    %v116 = vsel %vm81, %v44, 0
    %v119 = vsel %vm81, %v45, 0
    %v122 = vsel %vm81, %v46, 0
    %v125 = vsel %vm81, %v47, 0
    %v128 = vsel %vm81, %v48, 0
    %v131 = vsel %vm81, %v49, 0
    %v134 = vsel %vm81, %v50, 0
    %v137 = vsel %vm81, %v51, 0
    %v140 = vsel %vm81, %v52, 0
    %142 = vmatprep.subr.mxu0 0.0
    %143 = vmatpush1.xpose.msra.mxu0 %v95
    %144 = vmatprep.subr.mxu0 0.0
    %145 = vmatpush1.xpose.msra.mxu0 %v98
    %146 = vmatprep.subr.mxu0 0.0
    %147 = vmatpush1.xpose.msra.mxu0 %v101
    %148 = vmatprep.subr.mxu0 0.0
    %149 = vmatpush1.xpose.msra.mxu0 %v104
    %150 = vmatprep.subr.mxu0 0.0
    %151 = vmatpush1.xpose.msra.mxu0 %v107
    %152 = vmatprep.subr.mxu0 0.0
    %153 = vmatpush1.xpose.msra.mxu0 %v110
    %154 = vmatprep.subr.mxu0 0.0
    %155 = vmatpush1.xpose.msra.mxu0 %v113
    %156 = vmatprep.subr.mxu0 0.0
    %157 = vmatpush1.xpose.msra.mxu0 %v116
    %158 = vmatprep.subr.mxu0 0.0
    %159 = vmatpush1.xpose.msra.mxu0 %v119
    %160 = vmatprep.subr.mxu0 0.0
    %161 = vmatpush1.xpose.msra.mxu0 %v122
    %162 = vmatprep.subr.mxu0 0.0
    %163 = vmatpush1.xpose.msra.mxu0 %v125
    %164 = vmatprep.subr.mxu0 0.0
    %165 = vmatpush1.xpose.msra.mxu0 %v128
    %166 = vmatprep.subr.mxu0 0.0
    %167 = vmatpush1.xpose.msra.mxu0 %v131
    %168 = vmatprep.subr.mxu0 0.0
    %169 = vmatpush1.xpose.msra.mxu0 %v134
    %170 = vmatprep.subr.mxu0 0.0
    %171 = vmatpush1.xpose.msra.mxu0 %v137
    %172 = vmatprep.subr.mxu0 0.0
    %173 = vmatpush1.xpose.msra.mxu0 %v140
    %174 = vmatprep.subr.mxu0 0.0
    %175 = vmatpush1.xpose.msra.mxu0 0.0
    %176 = vmatprep.subr.mxu0 0.0
    %177 = vmatpush1.xpose.msra.mxu0 0.0
    %178 = vmatprep.subr.mxu0 0.0
    %179 = vmatpush1.xpose.msra.mxu0 0.0
    %180 = vmatprep.subr.mxu0 0.0
    %181 = vmatpush1.xpose.msra.mxu0 0.0
    %182 = vmatprep.subr.mxu0 0.0
    %183 = vmatpush1.xpose.msra.mxu0 0.0
    %184 = vmatprep.subr.mxu0 0.0
    %185 = vmatpush1.xpose.msra.mxu0 0.0
    %186 = vmatprep.subr.mxu0 0.0
    %187 = vmatpush1.xpose.msra.mxu0 0.0
    %188 = vmatprep.subr.mxu0 0.0
    %189 = vmatpush1.xpose.msra.mxu0 0.0
    %190 = vmatprep.subr.mxu0 0.0
    %191 = vmatpush1.xpose.msra.mxu0 0.0
    %192 = vmatprep.subr.mxu0 0.0
    %193 = vmatpush1.xpose.msra.mxu0 0.0
    %194 = vmatprep.subr.mxu0 0.0
    %195 = vmatpush1.xpose.msra.mxu0 0.0
    %196 = vmatprep.subr.mxu0 0.0
    %197 = vmatpush1.xpose.msra.mxu0 0.0
    %198 = vmatprep.subr.mxu0 0.0
    %199 = vmatpush1.xpose.msra.mxu0 0.0
    %200 = vmatprep.subr.mxu0 0.0
    %201 = vmatpush1.xpose.msra.mxu0 0.0
    %202 = vmatprep.subr.mxu0 0.0
    %203 = vmatpush1.xpose.msra.mxu0 0.0
    %204 = vmatprep.subr.mxu0 0.0
    %205 = vmatpush1.xpose.msra.mxu0 0.0
    %206 = vmatprep.mubr.f32.mxu0 0.0
    %207 = vmatmul.mubr.f32.gmra.mrb[0].mxu0 %v83
    %v208 = vpop.f32.mrb[0].mxu0
    %v209 = vadd.f32 %v64, %v208
    %v210 = vpop.f32.mrb[0].mxu0
    %211 = vmatprep.mubr.f32.mxu0 0.0
    %212 = vmatmul.mubr.f32.gmra.mrb[0].mxu0 %v86
    %v213 = vpop.f32.mrb[0].mxu0
    %v214 = vadd.f32 %v69, %v213
    %v215 = vpop.f32.mrb[0].mxu0
    %216 = vmatprep.mubr.f32.mxu0 0.0
    %217 = vmatmul.mubr.f32.gmra.mrb[0].mxu0 %v89
    %v218 = vpop.f32.mrb[0].mxu0
    %v219 = vadd.f32 %v74, %v218
    %v220 = vpop.f32.mrb[0].mxu0
    %221 = vmatprep.mubr.f32.mxu0 0.0
    %222 = vmatmul.mubr.f32.gmra.mrb[0].mxu0 %v92
    %v223 = vpop.f32.mrb[0].mxu0
    %v224 = vadd.f32 %v79, %v223
    %v225 = vpop.f32.mrb[0].mxu0
    %226 = vdwg.mxu0
    %v227 = vmax.f32 %v209, 0.0
    %v228 = vmax.f32 %v214, 0.0
    %v229 = vmax.f32 %v219, 0.0
    %v230 = vmax.f32 %v224, 0.0
    %v231 = vld [vmem:[%s3] sm:$0x1]
    %v232 = vld [vmem:[#allocation2] sm:$0x1]
    %234 = vset.pattern.permute.xlu0 0
    %235 = vperm.xlu0 %234, %v232
    %v236 = vpop.permute.xlu0 %235
    %v238 = vlaneseq
    %v239 = vshrl.u32 %v238, 7
    %v240 = vsub.s32 0, %v239
    %v241 = vrot.slane %v236, %v240
    %v243 = vsel %vm81, %v231, 0
    %245 = vmatprep.subr.mxu0 0.0
    %246 = vmatpush1.msra.mxu0 %v227
    %247 = vmatprep.subr.mxu0 0.0
    %248 = vmatpush1.msra.mxu0 %v228
    %249 = vmatprep.subr.mxu0 0.0
    %250 = vmatpush1.msra.mxu0 %v229
    %251 = vmatprep.subr.mxu0 0.0
    %252 = vmatpush1.msra.mxu0 %v230
    %253 = vmatprep.subr.mxu0 0.0
    %254 = vmatpush1.msra.mxu0 0.0
    %255 = vmatprep.subr.mxu0 0.0
    %256 = vmatpush1.msra.mxu0 0.0
    %257 = vmatprep.subr.mxu0 0.0
    %258 = vmatpush1.msra.mxu0 0.0
    %259 = vmatprep.subr.mxu0 0.0
    %260 = vmatpush1.msra.mxu0 0.0
    %261 = vmatprep.subr.mxu0 0.0
    %262 = vmatpush1.msra.mxu0 0.0
    %263 = vmatprep.subr.mxu0 0.0
    %264 = vmatpush1.msra.mxu0 0.0
    %265 = vmatprep.subr.mxu0 0.0
    %266 = vmatpush1.msra.mxu0 0.0
    %267 = vmatprep.subr.mxu0 0.0
    %268 = vmatpush1.msra.mxu0 0.0
    %269 = vmatprep.subr.mxu0 0.0
    %270 = vmatpush1.msra.mxu0 0.0
    %271 = vmatprep.subr.mxu0 0.0
    %272 = vmatpush1.msra.mxu0 0.0
    %273 = vmatprep.subr.mxu0 0.0
    %274 = vmatpush1.msra.mxu0 0.0
    %275 = vmatprep.subr.mxu0 0.0
    %276 = vmatpush1.msra.mxu0 0.0
    %277 = vmatprep.subr.mxu0 0.0
    %278 = vmatpush1.msra.mxu0 0.0
    %279 = vmatprep.subr.mxu0 0.0
    %280 = vmatpush1.msra.mxu0 0.0
    %281 = vmatprep.subr.mxu0 0.0
    %282 = vmatpush1.msra.mxu0 0.0
    %283 = vmatprep.subr.mxu0 0.0
    %284 = vmatpush1.msra.mxu0 0.0
    %285 = vmatprep.subr.mxu0 0.0
    %286 = vmatpush1.msra.mxu0 0.0
    %287 = vmatprep.subr.mxu0 0.0
    %288 = vmatpush1.msra.mxu0 0.0
    %289 = vmatprep.subr.mxu0 0.0
    %290 = vmatpush1.msra.mxu0 0.0
    %291 = vmatprep.subr.mxu0 0.0
    %292 = vmatpush1.msra.mxu0 0.0
    %293 = vmatprep.subr.mxu0 0.0
    %294 = vmatpush1.msra.mxu0 0.0
    %295 = vmatprep.subr.mxu0 0.0
    %296 = vmatpush1.msra.mxu0 0.0
    %297 = vmatprep.subr.mxu0 0.0
    %298 = vmatpush1.msra.mxu0 0.0
    %299 = vmatprep.subr.mxu0 0.0
    %300 = vmatpush1.msra.mxu0 0.0
    %301 = vmatprep.subr.mxu0 0.0
    %302 = vmatpush1.msra.mxu0 0.0
    %303 = vmatprep.subr.mxu0 0.0
    %304 = vmatpush1.msra.mxu0 0.0
    %305 = vmatprep.subr.mxu0 0.0
    %306 = vmatpush1.msra.mxu0 0.0
    %307 = vmatprep.subr.mxu0 0.0
    %308 = vmatpush1.msra.mxu0 0.0
    %309 = vmatprep.mubr.f32.mxu0 0.0
    %310 = vmatmul.mubr.f32.gmra.mrb[0].mxu0 %v243
    %v311 = vpop.f32.mrb[0].mxu0
    %v312 = vadd.f32 %v241, %v311
    %v313 = vpop.f32.mrb[0].mxu0
    %314 = vdwg.mxu0
    %315 = vst [vmem:[#allocation6] sm:$0x1] %v312
    // Predicated region
    $region26: #{tpu_custom_call.1} parent=1 // pred_check
      _
    $region27: #{tpu_custom_call.1} parent=1 // pred_check_branch
      %317 = sbr.rel (0) target = $region29
    $region28: #{tpu_custom_call.1} parent=1 // pred_region
      %s319 = ssub.s32 16, 16
      %320 = vsyncadd [#allocation5], %s319
      %s322 = sshll.u32 [#allocation6], 4
      %s323 = int_to_ptr.vmem [resolvable:$true] %s322
      %325 = dma.vmem_to_hbm [thread:$0]  %s323, 16, %s5, [#allocation5]
    $region29: #{tpu_custom_call.1} parent=1 // pred_fallthru
      _
    // Predicated region
    $region30: #{tpu_custom_call.1} parent=1 // pred_check
      _
    $region31: #{tpu_custom_call.1} parent=1 // pred_check_branch
      %327 = sbr.rel (0) target = $region33
    $region32: #{tpu_custom_call.1} parent=1 // pred_region
      %328 = dma.done [#allocation5], 16
    $region33: #{tpu_custom_call.1} parent=1 // pred_fallthru
      _
    %329 = vsyncpa [#allocation4], 1
    %330 = vsyncpa [#allocation5], 1

</llo_original>
